<compile_context>
chip_gen: v5e
topology: v5e:2x2
jax: 0.10.0
libtpu: 0.0.40
codegen_flags: <defaults>
</compile_context>

<pallas_src>
import functools

import jax
import jax.numpy as jnp
from jax.experimental import pallas as pl
from jax.experimental.pallas import tpu as pltpu

TEMP_DIM = 128          # hidden size of the "temp" layer (fixed in the module)
OUT_PAD = 128           # lane-dense padded action dimension
NEG_BIG = -1e30         # finite "-inf" baked into padded bias columns


def policy_kernel(he_ref, tg_ref, w_ref, b_ref, out_ref):
    H = he_ref.shape[1]
    E = tg_ref.shape[1]
    K = w_ref.shape[0]            # H + E + TEMP_DIM

    b = b_ref[...]                # [2, 128] f32 (row 0: fused bias1, row 1: padded bias2)

    # First (fused) layer: two MXU pushes against static slices of the packed
    # weight slab, f32 accumulation, one pre-fused bias add, tanh on the VPU.
    temp = jnp.dot(he_ref[...], w_ref[0:H, :], preferred_element_type=jnp.float32)
    temp = temp + jnp.dot(tg_ref[...], w_ref[H:H + E, :],
                          preferred_element_type=jnp.float32)
    temp = jnp.tanh(temp + b[0:1, :])

    # Second layer over the lane-dense, zero-padded 128-wide output.  The
    # padded columns of bias row 1 are -1e30, so they carry zero softmax mass
    # without any in-kernel masking.
    logits = jnp.dot(temp, w_ref[H + E:K, :],
                     preferred_element_type=jnp.float32) + b[1:2, :]

    # Softmax over the action axis (PyTorch dim=1).
    m = jnp.max(logits, axis=-1, keepdims=True)
    e = jnp.exp(logits - m)
    s = jnp.sum(e, axis=-1, keepdims=True)
    out_ref[...] = e * pl.reciprocal(s, approx=False)   # exact: rows sum to 1


@functools.partial(jax.jit, static_argnames=("action_num", "block_b"))
def policy_forward(h_e, target, params, *, action_num, block_b=256):
    B, H = h_e.shape
    E = target.shape[1]
    wpack, bpack = params["w"], params["b"]

    if B % block_b == 0 and B // block_b > 1:
        # Large-batch path: 1-D parallel grid over the batch (2x on v7x's two
        # TensorCores; bounds VMEM-resident intermediates as B scales).
        out_padded = pl.pallas_call(
            policy_kernel,
            out_shape=jax.ShapeDtypeStruct((B, OUT_PAD), jnp.float32),
            grid=(B // block_b,),
            in_specs=[
                pl.BlockSpec((block_b, H), lambda i: (i, 0)),
                pl.BlockSpec((block_b, E), lambda i: (i, 0)),
                pl.BlockSpec(wpack.shape, lambda i: (0, 0)),
                pl.BlockSpec(bpack.shape, lambda i: (0, 0)),
            ],
            out_specs=pl.BlockSpec((block_b, OUT_PAD), lambda i: (i, 0)),
            compiler_params=pltpu.CompilerParams(
                dimension_semantics=("parallel",)),
        )(h_e, target, wpack, bpack)
    else:
        # Small-batch path: whole problem in VMEM, no grid, minimal DMA count.
        vmem = pl.BlockSpec(memory_space=pltpu.MemorySpace.VMEM)
        out_padded = pl.pallas_call(
            policy_kernel,
            out_shape=jax.ShapeDtypeStruct((B, OUT_PAD), jnp.float32),
            in_specs=[vmem] * 4,
            out_specs=vmem,
        )(h_e, target, wpack, bpack)

    # Slice the padded lane-dense output back to the real action dimension.
    return out_padded[:, :action_num]


def reference_forward(h_e, target, raw):
    temp = h_e @ raw["w_enc"] + raw["b_enc"] + target @ raw["w_tgt"] + raw["b_tgt"]
    temp = jnp.tanh(temp)
    logits = temp @ raw["w_act"] + raw["b_act"]
    return jax.nn.softmax(logits, axis=1)


def init_params(key, hidden_dim, embed_dim, action_num, temp_dim=TEMP_DIM):
    ks = jax.random.split(key, 6)

    # Deterministic synthetic init (uniform, PyTorch-Linear-like bound).
    def lin(kw, kb, fan_in, fan_out):
        bound = 1.0 / jnp.sqrt(fan_in)
        w = jax.random.uniform(kw, (fan_in, fan_out), jnp.float32, -bound, bound)
        b = jax.random.uniform(kb, (1, fan_out), jnp.float32, -bound, bound)
        return w, b

    w_enc, b_enc = lin(ks[0], ks[1], hidden_dim, temp_dim)
    w_tgt, b_tgt = lin(ks[2], ks[3], embed_dim, temp_dim)
    w_act, b_act = lin(ks[4], ks[5], temp_dim, action_num)

    raw = dict(w_enc=w_enc, b_enc=b_enc, w_tgt=w_tgt, b_tgt=b_tgt,
               w_act=w_act, b_act=b_act)

    # --- Packed / padded parameters used by the kernel --------------------
    # Second-layer weights zero-padded to 128 lane-dense output columns.
    w_act_pad = jnp.zeros((temp_dim, OUT_PAD), jnp.float32)
    w_act_pad = w_act_pad.at[:, :action_num].set(w_act)
    # Single weight slab: [enc2temp ; target2temp ; state2action_padded].
    wpack = jnp.concatenate([w_enc, w_tgt, w_act_pad], axis=0)     # [H+E+128, 128]
    # Single bias slab: row 0 = fused first-layer bias; row 1 = second-layer
    # bias with -1e30 baked into the padded action columns (mask-in-weights).
    b1 = (b_enc + b_tgt).reshape(temp_dim)
    b2 = jnp.full((OUT_PAD,), NEG_BIG, jnp.float32).at[:action_num].set(
        b_act.reshape(action_num))
    bpack = jnp.stack([b1, b2], axis=0)                            # [2, 128]

    params = dict(w=wpack, b=bpack)
    return params, raw


if __name__ == "__main__":
    HIDDEN_DIM = 32    # config.hidden_dim
    EMBED_DIM = 32     # config.embed_dim
    ACTION_NUM = 4     # len(config.actions)

    key = jax.random.PRNGKey(0)
    k_p, k_he, k_tg, k_he2, k_tg2 = jax.random.split(key, 5)

    params, raw = init_params(k_p, HIDDEN_DIM, EMBED_DIM, ACTION_NUM)

    # --- Small batch (no grid), the shape the agent actually uses ---------
    B = 8
    h_e = jax.random.normal(k_he, (B, HIDDEN_DIM), jnp.float32)      # current_context
    target = jax.random.normal(k_tg, (B, EMBED_DIM), jnp.float32)    # target

    out = policy_forward(h_e, target, params, action_num=ACTION_NUM)
    out = jax.block_until_ready(out)
    ref = reference_forward(h_e, target, raw)

    assert out.shape == (B, ACTION_NUM)
    assert jnp.allclose(out, ref, atol=1e-4, rtol=1e-4), "mismatch vs reference (B=8)"
    assert jnp.allclose(jnp.sum(out, axis=1), jnp.ones((B,)), atol=1e-5)

    # --- Large batch (parallel batch grid path) ----------------------------
    BL = 512
    h_e_l = jax.random.normal(k_he2, (BL, HIDDEN_DIM), jnp.float32)
    target_l = jax.random.normal(k_tg2, (BL, EMBED_DIM), jnp.float32)

    out_l = policy_forward(h_e_l, target_l, params, action_num=ACTION_NUM)
    out_l = jax.block_until_ready(out_l)
    ref_l = reference_forward(h_e_l, target_l, raw)

    assert out_l.shape == (BL, ACTION_NUM)
    assert jnp.allclose(out_l, ref_l, atol=1e-4, rtol=1e-4), "mismatch vs reference (B=512)"
    assert jnp.allclose(jnp.sum(out_l, axis=1), jnp.ones((BL,)), atol=1e-5)

    print("KERNEL_OK")
</pallas_src>

<mosaic_0001>
module attributes {stable_mosaic.version = 11 : i64} {
  func.func @policy_kernel(%arg0: memref<8x32xf32, #tpu.memory_space<vmem>>, %arg1: memref<8x32xf32, #tpu.memory_space<vmem>>, %arg2: memref<192x128xf32, #tpu.memory_space<vmem>>, %arg3: memref<2x128xf32, #tpu.memory_space<vmem>>, %arg4: memref<8x128xf32, #tpu.memory_space<vmem>>) attributes {dimension_semantics = [], scalar_prefetch = 0 : i64, scratch_operands = 0 : i64, tpu.core_type = #tpu.core_type<tc>} {
    %c0 = arith.constant 0 : index
    %c0_0 = arith.constant 0 : index
    %0 = vector.load %arg3[%c0, %c0_0] : memref<2x128xf32, #tpu.memory_space<vmem>>, vector<2x128xf32>
    %c0_1 = arith.constant 0 : index
    %c0_2 = arith.constant 0 : index
    %1 = vector.load %arg0[%c0_1, %c0_2] : memref<8x32xf32, #tpu.memory_space<vmem>>, vector<8x32xf32>
    %c0_3 = arith.constant 0 : index
    %c0_4 = arith.constant 0 : index
    %2 = vector.load %arg2[%c0_3, %c0_4] : memref<192x128xf32, #tpu.memory_space<vmem>>, vector<32x128xf32>
    %cst = arith.constant dense<0.000000e+00> : vector<8x128xf32>
    %3 = tpu.matmul %1, %2, %cst {dimension_numbers = #tpu.dot_dimension_numbers<[1], [0], [0], [1], [0, 0, 1, 1], [], []>} : vector<8x32xf32>, vector<32x128xf32>, vector<8x128xf32> -> vector<8x128xf32>
    %c0_5 = arith.constant 0 : index
    %c0_6 = arith.constant 0 : index
    %4 = vector.load %arg1[%c0_5, %c0_6] : memref<8x32xf32, #tpu.memory_space<vmem>>, vector<8x32xf32>
    %c32 = arith.constant 32 : index
    %c0_7 = arith.constant 0 : index
    %5 = vector.load %arg2[%c32, %c0_7] : memref<192x128xf32, #tpu.memory_space<vmem>>, vector<32x128xf32>
    %cst_8 = arith.constant dense<0.000000e+00> : vector<8x128xf32>
    %6 = tpu.matmul %4, %5, %cst_8 {dimension_numbers = #tpu.dot_dimension_numbers<[1], [0], [0], [1], [0, 0, 1, 1], [], []>} : vector<8x32xf32>, vector<32x128xf32>, vector<8x128xf32> -> vector<8x128xf32>
    %7 = arith.addf %3, %6 : vector<8x128xf32>
    %8 = vector.extract_strided_slice %0 {offsets = [0, 0], sizes = [1, 128], strides = [1, 1]} : vector<2x128xf32> to vector<1x128xf32>
    %9 = vector.broadcast %8 : vector<1x128xf32> to vector<8x128xf32>
    %10 = arith.addf %7, %9 : vector<8x128xf32>
    %11 = math.tanh %10 : vector<8x128xf32>
    %c64 = arith.constant 64 : index
    %c0_9 = arith.constant 0 : index
    %12 = vector.load %arg2[%c64, %c0_9] : memref<192x128xf32, #tpu.memory_space<vmem>>, vector<128x128xf32>
    %cst_10 = arith.constant dense<0.000000e+00> : vector<8x128xf32>
    %13 = tpu.matmul %11, %12, %cst_10 {dimension_numbers = #tpu.dot_dimension_numbers<[1], [0], [0], [1], [0, 0, 1, 1], [], []>} : vector<8x128xf32>, vector<128x128xf32>, vector<8x128xf32> -> vector<8x128xf32>
    %14 = vector.extract_strided_slice %0 {offsets = [1, 0], sizes = [1, 128], strides = [1, 1]} : vector<2x128xf32> to vector<1x128xf32>
    %15 = vector.broadcast %14 : vector<1x128xf32> to vector<8x128xf32>
    %16 = arith.addf %13, %15 : vector<8x128xf32>
    %cst_11 = arith.constant dense<0xFF800000> : vector<8xf32>
    %17 = vector.multi_reduction <maximumf>, %16, %cst_11 [1] : vector<8x128xf32> to vector<8xf32>
    %18 = vector.shape_cast %17 : vector<8xf32> to vector<8x1xf32>
    %19 = vector.broadcast %18 : vector<8x1xf32> to vector<8x128xf32>
    %20 = arith.subf %16, %19 : vector<8x128xf32>
    %21 = math.exp %20 : vector<8x128xf32>
    %cst_12 = arith.constant dense<0.000000e+00> : vector<8xf32>
    %22 = vector.multi_reduction <add>, %21, %cst_12 [1] : vector<8x128xf32> to vector<8xf32>
    %23 = vector.shape_cast %22 : vector<8xf32> to vector<8x1xf32>
    %24 = tpu.reciprocal %23 : vector<8x1xf32> -> vector<8x1xf32>
    %25 = vector.broadcast %24 : vector<8x1xf32> to vector<8x128xf32>
    %26 = arith.mulf %21, %25 : vector<8x128xf32>
    %c0_13 = arith.constant 0 : index
    %c0_14 = arith.constant 0 : index
    %27 = vector.load %arg4[%c0_13, %c0_14] : memref<8x128xf32, #tpu.memory_space<vmem>>, vector<8x128xf32>
    tpu.vector_store %arg4[%c0_13, %c0_14], %26 {strides = array<i32>} : memref<8x128xf32, #tpu.memory_space<vmem>>, vector<8x128xf32>,
    return
  }
}

</mosaic_0001>

<llo_original>
// kernel: policy_forward.1
$region0: #{policy_forward.1}
  #allocation0 [shape = 'u32[]', space=smem, size = 0x4, offset = 0x4, fixed_abs, tag = 'smem constant byte address 0x4 - core index']
  #allocation1 [shape = 'u32[72,128]{1,0:T(1,128)}', space=vmem, size = 0x9000, scoped, tag = 'internal scratch']
  %s0 = inlined_call_operand.hbm [shape: f32[8,32], index: 0, kind: input, shape index: {}]
  %s1 = inlined_call_operand.hbm [shape: f32[8,32], index: 1, kind: input, shape index: {}]
  %s2 = inlined_call_operand.hbm [shape: f32[192,128], index: 2, kind: input, shape index: {}]
  %s3 = inlined_call_operand.hbm [shape: f32[2,128], index: 3, kind: input, shape index: {}]
  %s4 = inlined_call_operand.vmem [shape: f32[8,128], index: 4, kind: output, shape index: {}]
  %s5 = sld [smem:[#allocation0]]
  $region42: #{policy_forward.1} parent=0
    _
  %s7 = ssub.s32 1, %s5
  %s8 = scalar_select 0, %s7, %s5
  $region1: #{policy_forward.1} parent=0
    #allocation2 [shape = 'u8[4096]{0}', space=vmem, size = 0x1000, scoped, tag = 'input window, operand 0, single buffered']
    #allocation3 [shape = 's32[1]{0}', space=sflag, size = 0x4, scoped, tag = 'scoped memory for policy_forward.1']
    #allocation4 [shape = 'u8[4096]{0}', space=vmem, size = 0x1000, scoped, tag = 'input window, operand 1, single buffered']
    #allocation5 [shape = 's32[1]{0}', space=sflag, size = 0x4, scoped, tag = 'scoped memory for policy_forward.1']
    #allocation6 [shape = 'u8[98304]{0}', space=vmem, size = 0x18000, scoped, tag = 'input window, operand 2, single buffered']
    #allocation7 [shape = 'u8[1024]{0}', space=vmem, size = 0x400, scoped, tag = 'input window, operand 3, single buffered']
    #allocation8 [shape = 's32[1]{0}', space=sflag, size = 0x4, scoped, tag = 'scoped memory for policy_forward.1']
    %9 = vsyncpa [#allocation3], 0
    %10 = vsyncpa [#allocation5], 0
    %11 = vsyncpa [#allocation8], 0
    // Predicated region
    $region2: #{policy_forward.1} parent=1 // pred_check
      _
    $region3: #{policy_forward.1} parent=1 // pred_check_branch
      %13 = sbr.rel (0) target = $region5
    $region4: #{policy_forward.1} parent=1 // pred_region
      %15 = vsyncadd [#allocation3], 0
      %s17 = sshll.u32 %s0, 4
      %s18 = int_to_ptr.hbm [resolvable:$true] %s17
      %s19 = sshll.u32 [#allocation2], 4
      %s20 = int_to_ptr.vmem [resolvable:$true] %s19
      %22 = dma.hbm_to_vmem [thread:$0]  %s18, 128, %s20, [#allocation3]
    $region5: #{policy_forward.1} parent=1 // pred_fallthru
      _
    // Predicated region
    $region6: #{policy_forward.1} parent=1 // pred_check
      _
    $region7: #{policy_forward.1} parent=1 // pred_check_branch
      %24 = sbr.rel (0) target = $region9
    $region8: #{policy_forward.1} parent=1 // pred_region
      %26 = vsyncadd [#allocation5], 0
      %s28 = sshll.u32 %s1, 4
      %s29 = int_to_ptr.hbm [resolvable:$true] %s28
      %s30 = sshll.u32 [#allocation4], 4
      %s31 = int_to_ptr.vmem [resolvable:$true] %s30
      %33 = dma.hbm_to_vmem [thread:$0]  %s29, 128, %s31, [#allocation5]
    $region9: #{policy_forward.1} parent=1 // pred_fallthru
      _
    // Predicated region
    $region10: #{policy_forward.1} parent=1 // pred_check
      _
    $region11: #{policy_forward.1} parent=1 // pred_check_branch
      %35 = sbr.rel (0) target = $region13
    $region12: #{policy_forward.1} parent=1 // pred_region
      %37 = vsyncadd [#allocation5], 0
      %s38 = sshll.u32 %s2, 4
      %s39 = int_to_ptr.hbm [resolvable:$true] %s38
      %s40 = sshll.u32 [#allocation6], 4
      %s41 = int_to_ptr.vmem [resolvable:$true] %s40
      %46 = dma.hbm_to_vmem [thread:$0]  %s39, 3072, %s41, [#allocation5], 128, 128, 8
    $region13: #{policy_forward.1} parent=1 // pred_fallthru
      _
    // Predicated region
    $region14: #{policy_forward.1} parent=1 // pred_check
      _
    $region15: #{policy_forward.1} parent=1 // pred_check_branch
      %48 = sbr.rel (0) target = $region17
    $region16: #{policy_forward.1} parent=1 // pred_region
      %50 = vsyncadd [#allocation8], 0
      %s52 = sshll.u32 %s3, 4
      %s53 = int_to_ptr.hbm [resolvable:$true] %s52
      %s54 = sshll.u32 [#allocation7], 4
      %s55 = int_to_ptr.vmem [resolvable:$true] %s54
      %57 = dma.hbm_to_vmem [thread:$0]  %s53, 32, %s55, [#allocation8]
    $region17: #{policy_forward.1} parent=1 // pred_fallthru
      _
    // Predicated region
    $region18: #{policy_forward.1} parent=1 // pred_check
      _
    $region19: #{policy_forward.1} parent=1 // pred_check_branch
      %59 = sbr.rel (0) target = $region21
    $region20: #{policy_forward.1} parent=1 // pred_region
      %61 = dma.done [#allocation3], 128
    $region21: #{policy_forward.1} parent=1 // pred_fallthru
      _
    // Predicated region
    $region22: #{policy_forward.1} parent=1 // pred_check
      _
    $region23: #{policy_forward.1} parent=1 // pred_check_branch
      %63 = sbr.rel (0) target = $region25
    $region24: #{policy_forward.1} parent=1 // pred_region
      %65 = dma.done [#allocation5], 128
    $region25: #{policy_forward.1} parent=1 // pred_fallthru
      _
    // Predicated region
    $region26: #{policy_forward.1} parent=1 // pred_check
      _
    $region27: #{policy_forward.1} parent=1 // pred_check_branch
      %67 = sbr.rel (0) target = $region29
    $region28: #{policy_forward.1} parent=1 // pred_region
      %69 = dma.done [#allocation5], 3072
    $region29: #{policy_forward.1} parent=1 // pred_fallthru
      _
    // Predicated region
    $region30: #{policy_forward.1} parent=1 // pred_check
      _
    $region31: #{policy_forward.1} parent=1 // pred_check_branch
      %71 = sbr.rel (0) target = $region33
    $region32: #{policy_forward.1} parent=1 // pred_region
      %73 = dma.done [#allocation8], 32
    $region33: #{policy_forward.1} parent=1 // pred_fallthru
      _
    %v74 = vld [vmem:[#allocation7] sm:$0x3]
    %v75 = vld [vmem:[#allocation2] sm:$0xff]
    %v76 = vld [vmem:[#allocation6] sm:$0xff]
    %v77 = vld [vmem:[#allocation6 + $0x8] sm:$0xff]
    %v78 = vld [vmem:[#allocation6 + $0x10] sm:$0xff]
    %v79 = vld [vmem:[#allocation6 + $0x18] sm:$0xff]
    %v80 = vld [vmem:[#allocation4] sm:$0xff]
    %v81 = vld [vmem:[#allocation6 + $0x20] sm:$0xff]
    %v82 = vld [vmem:[#allocation6 + $0x28] sm:$0xff]
    %v83 = vld [vmem:[#allocation6 + $0x30] sm:$0xff]
    %v84 = vld [vmem:[#allocation6 + $0x38] sm:$0xff]
    %vm85 = vcmask 261120
    %v87 = vsel %vm85, %v80, 0
    %89 = vmatpush.msra.mxu0 0.0
    %90 = vmatpush.msra.mxu0 0.0
    %91 = vmatpush.msra.mxu0 0.0
    %92 = vmatpush.msra.mxu0 0.0
    %93 = vmatpush.msra.mxu0 0.0
    %94 = vmatpush.msra.mxu0 0.0
    %95 = vmatpush.msra.mxu0 0.0
    %96 = vmatpush.msra.mxu0 0.0
    %97 = vmatpush.msra.mxu0 0.0
    %98 = vmatpush.msra.mxu0 0.0
    %99 = vmatpush.msra.mxu0 0.0
    %100 = vmatpush.msra.mxu0 0.0
    %101 = vmatpush.msra.mxu0 %v84
    %102 = vmatpush.msra.mxu0 %v83
    %103 = vmatpush.msra.mxu0 %v82
    %104 = vmatpush.msra.mxu0 %v81
    %105 = vmatmul.f32.gmra.mxu0 %v87
    %v106 = vpop.f32.mrf.mxu0
    %v107 = vadd.f32 0.0, %v106
    %108 = vdwg.mxu0
    %v110 = vsel %vm85, %v75, 0
    %112 = vmatpush.msra.mxu0 0.0
    %113 = vmatpush.msra.mxu0 0.0
    %114 = vmatpush.msra.mxu0 0.0
    %115 = vmatpush.msra.mxu0 0.0
    %116 = vmatpush.msra.mxu0 0.0
    %117 = vmatpush.msra.mxu0 0.0
    %118 = vmatpush.msra.mxu0 0.0
    %119 = vmatpush.msra.mxu0 0.0
    %120 = vmatpush.msra.mxu0 0.0
    %121 = vmatpush.msra.mxu0 0.0
    %122 = vmatpush.msra.mxu0 0.0
    %123 = vmatpush.msra.mxu0 0.0
    %124 = vmatpush.msra.mxu0 %v79
    %125 = vmatpush.msra.mxu0 %v78
    %126 = vmatpush.msra.mxu0 %v77
    %127 = vmatpush.msra.mxu0 %v76
    %128 = vmatmul.f32.gmra.mxu0 %v110
    %v129 = vpop.f32.mrf.mxu0
    %v130 = vadd.f32 %v107, %v129
    %131 = vdwg.mxu0
    %v132 = vperm.slane %v74, 0
    %v133 = vadd.f32 %v130, %v132
    %v134 = vtanh.pop %v133
    %v135 = vld [vmem:[#allocation6 + $0x40] sm:$0xff]
    %v136 = vld [vmem:[#allocation6 + $0x48] sm:$0xff]
    %v137 = vld [vmem:[#allocation6 + $0x50] sm:$0xff]
    %v138 = vld [vmem:[#allocation6 + $0x58] sm:$0xff]
    %v139 = vld [vmem:[#allocation6 + $0x60] sm:$0xff]
    %v140 = vld [vmem:[#allocation6 + $0x68] sm:$0xff]
    %v141 = vld [vmem:[#allocation6 + $0x70] sm:$0xff]
    %v142 = vld [vmem:[#allocation6 + $0x78] sm:$0xff]
    %v143 = vld [vmem:[#allocation6 + $0x80] sm:$0xff]
    %v144 = vld [vmem:[#allocation6 + $0x88] sm:$0xff]
    %v145 = vld [vmem:[#allocation6 + $0x90] sm:$0xff]
    %v146 = vld [vmem:[#allocation6 + $0x98] sm:$0xff]
    %v147 = vld [vmem:[#allocation6 + $0xa0] sm:$0xff]
    %v148 = vld [vmem:[#allocation6 + $0xa8] sm:$0xff]
    %v149 = vld [vmem:[#allocation6 + $0xb0] sm:$0xff]
    %v150 = vld [vmem:[#allocation6 + $0xb8] sm:$0xff]
    %v151 = vperm.slane %v74, 1
    %152 = vmatpush.msra.mxu0 %v150
    %153 = vmatpush.msra.mxu0 %v149
    %154 = vmatpush.msra.mxu0 %v148
    %155 = vmatpush.msra.mxu0 %v147
    %156 = vmatpush.msra.mxu0 %v146
    %157 = vmatpush.msra.mxu0 %v145
    %158 = vmatpush.msra.mxu0 %v144
    %159 = vmatpush.msra.mxu0 %v143
    %160 = vmatpush.msra.mxu0 %v142
    %161 = vmatpush.msra.mxu0 %v141
    %162 = vmatpush.msra.mxu0 %v140
    %163 = vmatpush.msra.mxu0 %v139
    %164 = vmatpush.msra.mxu0 %v138
    %165 = vmatpush.msra.mxu0 %v137
    %166 = vmatpush.msra.mxu0 %v136
    %167 = vmatpush.msra.mxu0 %v135
    %168 = vmatmul.f32.gmra.mxu0 %v134
    %v169 = vpop.f32.mrf.mxu0
    %v170 = vadd.f32 %v151, %v169
    %171 = vdwg.mxu0
    %172 = vmax.xlane.f32.xlu0 %v170
    %v173 = vpop.xlane.xlu0 %172
    %v174 = vsub.f32 %v170, %v173
    %v175 = vmul.f32 %v174, 1.442695
    %v176 = vpow.pop %v175
    %177 = vadd.xlane.f32.xlu0 %v176
    %v178 = vpop.xlane.xlu0 %177
    %v179 = vrcp.pop %v178
    %v180 = vmul.f32 %v178, %v179
    %v181 = vsub.f32 1.0, %v180
    %v182 = vmul.f32 %v179, %v181
    %v183 = vadd.f32 %v179, %v182
    %vm184 = vweird.f32 %v178
    %vm185 = vweird.f32 %v179
    %vm186 = vmor %vm184, %vm185
    %v187 = vsel %vm186, %v179, %v183
    %v188 = vand.u32 2147483647, %v178
    %vm189 = vcmp.eq.f32.partialorder %v188, 8.507059e+37
    %v190 = vand.u32 %v178, 2147483648
    %v191 = vor.u32 1.1754944e-38, %v190
    %v192 = vsel %vm189, %v191, %v187
    %v193 = vmul.f32 %v176, %v192
    %194 = vst [vmem:[%s4] sm:$0xff] %v193
    // Predicated region
    $region34: #{policy_forward.1} parent=1 // pred_check
      _
    $region35: #{policy_forward.1} parent=1 // pred_check_branch
      %196 = sbr.rel (0) target = $region37
    $region36: #{policy_forward.1} parent=1 // pred_region
      _
    $region37: #{policy_forward.1} parent=1 // pred_fallthru
      _
    // Predicated region
    $region38: #{policy_forward.1} parent=1 // pred_check
      _
    $region39: #{policy_forward.1} parent=1 // pred_check_branch
      %198 = sbr.rel (0) target = $region41
    $region40: #{policy_forward.1} parent=1 // pred_region
      _
    $region41: #{policy_forward.1} parent=1 // pred_fallthru
      _
    %199 = vsyncpa [#allocation3], 1
    %200 = vsyncpa [#allocation5], 1
    %201 = vsyncpa [#allocation8], 1

</llo_original>
